<compile_context>
chip_gen: v7x
topology: tpu7x:2x2x1
jax: 0.10.0
libtpu: 0.0.40
codegen_flags: <defaults>
</compile_context>

<pallas_src>
import numpy as np
import jax
import jax.numpy as jnp
from jax.experimental import pallas as pl
from jax.experimental.pallas import tpu as pltpu

LN_EPS = 1e-5                     # PyTorch LayerNorm default
_PAIR_TILE_CAP = 1024             # pairs per grid step (2*1024*(H+F)*4B << VMEM)
_VMEM_LIMIT = 32 * 1024 * 1024    # safe on v5e/v6e (128 MiB) and v7x (64 MiB)


def _round_up(x, m):
    return ((x + m - 1) // m) * m


def _pair_tile(b, cap=_PAIR_TILE_CAP):
    """Pairs per grid step.  Tiny batches use the full array (block == full
    dims is always legal); otherwise a sublane-aligned tile chosen so the grid
    has >= 2 steps, letting dimension_semantics=('parallel',) use both v7x
    TensorCores (no effect on single-TC v5e/v6e)."""
    if b <= 16:
        return b
    half = _round_up(pl.cdiv(b, 2), 8)
    return min(cap, half)


def _replicated_spec(shape):
    """Full-array block with a constant block index (weights/biases)."""
    zeros = (0,) * len(shape)
    return pl.BlockSpec(shape, lambda i, _z=zeros: _z)


# ----------------------------- Pallas kernel -----------------------------

def _fused_head_kernel(zs_ref, zd_ref, pxs_ref, pxd_ref,
                       hew_ref, heb_ref, lng_ref, lnb_ref,
                       ginw_ref, ginb_ref, w1_ref, b1_ref, w2_ref, b2_ref,
                       o_ref):
    """Fully fused SANGraphormer head for one tile of TB graph pairs.
    All math is row-local, so partial (edge) tile padding rows are harmless."""
    tb = zs_ref.shape[0]
    hdim = hew_ref.shape[1]

    # ---- h_embedding + initial LayerNorm on the 2*TB src/dst node rows ----
    # One (2*TB, H) @ (H, H) MXU dot (sublane concat; no lane relayout).
    z2 = jnp.concatenate([zs_ref[...], zd_ref[...]], axis=0)
    y = jnp.dot(z2.astype(jnp.bfloat16), hew_ref[...],
                preferred_element_type=jnp.float32) + heb_ref[...]
    mu = jnp.mean(y, axis=-1, keepdims=True)
    var = jnp.mean((y - mu) ** 2, axis=-1, keepdims=True)
    hn = (y - mu) * jax.lax.rsqrt(var + LN_EPS) * lng_ref[...] + lnb_ref[...]

    # ---- Graphormer node-feature input encoder on the 2*TB pair rows ----
    px2 = jnp.concatenate([pxs_ref[...], pxd_ref[...]], axis=0)
    hg2 = jnp.dot(px2.astype(jnp.bfloat16), ginw_ref[...],
                  preferred_element_type=jnp.float32) + ginb_ref[...]

    # ---- src * dst products (contiguous sublane splits of the merged rows) ----
    h = hn[:tb, :] * hn[tb:, :]
    hg = hg2[:tb, :] * hg2[tb:, :]

    # ---- lin1 without lane concat: two MXU dots summed in one f32 acc ----
    z = (jnp.dot(h.astype(jnp.bfloat16), w1_ref[:hdim, :],
                 preferred_element_type=jnp.float32)
         + jnp.dot(hg.astype(jnp.bfloat16), w1_ref[hdim:, :],
                   preferred_element_type=jnp.float32)
         + b1_ref[...])
    z = jnp.maximum(z, 0.0)            # ReLU; dropout is identity in eval mode

    # ---- lin2: VPU multiply + lane reduction, written directly as (TB, 1) ----
    o_ref[...] = jnp.sum(z * w2_ref[...], axis=-1, keepdims=True) + b2_ref[...]


# ----------------------------- pallas_call wrapper -----------------------------

def fused_pair_head(z_src, z_dst, px_src, px_dst, p):
    b, hdim = z_src.shape
    fdim = px_src.shape[1]
    tb = _pair_tile(b)
    grid = (pl.cdiv(b, tb),)
    cost = pl.CostEstimate(
        flops=(2 * (2 * b) * hdim * hdim        # h_embedding on 2B rows
               + 2 * (2 * b) * fdim * hdim      # graphormer input encoder
               + 2 * b * (2 * hdim) * hdim      # lin1 (two K=H dots)
               + 10 * b * hdim),
        transcendentals=2 * b,                  # rsqrt per normalized row
        bytes_accessed=(4 * (2 * b * hdim + 2 * b * fdim + b)
                        + 2 * (hdim * hdim + fdim * hdim + 2 * hdim * hdim)
                        + 4 * (6 * hdim + 1)))
    return pl.pallas_call(
        _fused_head_kernel,
        out_shape=jax.ShapeDtypeStruct((b, 1), jnp.float32),
        grid=grid,
        in_specs=[pl.BlockSpec((tb, hdim), lambda i: (i, 0)),   # z_emb src rows
                  pl.BlockSpec((tb, hdim), lambda i: (i, 0)),   # z_emb dst rows
                  pl.BlockSpec((tb, fdim), lambda i: (i, 0)),   # pair_x row 0
                  pl.BlockSpec((tb, fdim), lambda i: (i, 0)),   # pair_x row 1
                  _replicated_spec(p["h_embedding_w"].shape),   # bf16 (H, H)
                  _replicated_spec(p["h_embedding_b"].shape),
                  _replicated_spec(p["ln_g"].shape),
                  _replicated_spec(p["ln_b"].shape),
                  _replicated_spec(p["graphormer_in_w"].shape), # bf16 (F, H)
                  _replicated_spec(p["graphormer_in_b"].shape),
                  _replicated_spec(p["lin1_w"].shape),          # bf16 (2H, H)
                  _replicated_spec(p["lin1_b"].shape),
                  _replicated_spec(p["lin2_w_row"].shape),      # f32 (1, H)
                  _replicated_spec(p["lin2_b"].shape)],
        out_specs=pl.BlockSpec((tb, 1), lambda i: (i, 0)),
        compiler_params=pltpu.CompilerParams(
            dimension_semantics=("parallel",),
            vmem_limit_bytes=_VMEM_LIMIT),
        cost_estimate=cost,
    )(z_src, z_dst, px_src, px_dst,
      p["h_embedding_w"], p["h_embedding_b"], p["ln_g"], p["ln_b"],
      p["graphormer_in_w"], p["graphormer_in_b"],
      p["lin1_w"], p["lin1_b"], p["lin2_w_row"], p["lin2_b"])


# ----------------------------- parameter init -----------------------------

def init_params(key, hidden, num_features, max_z):
    ks = jax.random.split(key, 16)

    def unif(k, shape, fan_in):
        bound = 1.0 / np.sqrt(max(fan_in, 1))
        return jax.random.uniform(k, shape, jnp.float32, -bound, bound)

    params = {
        # Embedding tables (PyTorch Embedding init ~ N(0,1)).
        "z_embedding": jax.random.normal(ks[0], (max_z, hidden), jnp.float32),
        "x_embedding": jax.random.normal(ks[1], (371, hidden), jnp.float32),  # dead: use_feature=False
        "e_embedding": jax.random.normal(ks[2], (2, hidden), jnp.float32),    # dead: identity layer stack
        # h_embedding: Linear(initial_channels=hidden, hidden); matmul weights
        # stored bf16 (MXU-native), biases / LN params stay f32.
        "h_embedding_w": unif(ks[3], (hidden, hidden), hidden).astype(jnp.bfloat16),
        "h_embedding_b": unif(ks[4], (1, hidden), hidden),
        # initial_layer_norm (shared for h and e in the module)
        "ln_g": jnp.ones((1, hidden), jnp.float32),
        "ln_b": jnp.zeros((1, hidden), jnp.float32),
        # Graphormer node-feature input encoder: Linear(num_features, hidden)
        "graphormer_in_w": unif(ks[5], (num_features, hidden),
                                num_features).astype(jnp.bfloat16),
        "graphormer_in_b": unif(ks[6], (1, hidden), num_features),
        # lin1: Linear(2*hidden, hidden) stored as one (2H, H) weight; the
        # kernel slices rows [:H] / [H:] statically (free) instead of lane-concat.
        "lin1_w": unif(ks[7], (2 * hidden, hidden), 2 * hidden).astype(jnp.bfloat16),
        "lin1_b": unif(ks[9], (1, hidden), 2 * hidden),
        # lin2: Linear(hidden, 1) stored as a (1, H) row for the VPU reduction
        "lin2_w_row": unif(ks[10], (1, hidden), hidden),
        "lin2_b": unif(ks[11], (1, 1), hidden),
    }
    return params


# ----------------------------- forward -----------------------------

def san_graphormer_forward(params, data, center_indices):
    z = data["z"].astype(jnp.int32)

    # Gather ONLY the 2B src/dst node rows that reach the head.  The full-N
    # h_embedding + LayerNorm pass is skipped because the transformer stack is
    # treated as identity, so no other node row is ever consumed.
    z_src_idx = jnp.take(z, center_indices, axis=0)
    z_dst_idx = jnp.take(z, center_indices + 1, axis=0)      # dst = center + 1 (module assumption)
    z_emb_src = jnp.take(params["z_embedding"], z_src_idx, axis=0)
    z_emb_dst = jnp.take(params["z_embedding"], z_dst_idx, axis=0)
    if z_emb_src.ndim == 3:                                    # multi-hop z labels
        z_emb_src = z_emb_src.sum(axis=1)
        z_emb_dst = z_emb_dst.sum(axis=1)

    # x_embedding / e_embedding / edge-LayerNorm paths are dead under
    # use_feature=False with an identity layer stack, so they are skipped.
    # TODO(synk): GraphTransformerLayer (SAN) stack source is not provided; it
    # is treated as identity on (h, e).  A real stack would need all N rows.
    # TODO(synk): Graphormer attention layers / structural biases source not
    # provided; only its node-feature input encoder (Linear) is implemented.
    # TODO(synk): for very large B / N the wrapper-side row gathers could move
    # into the kernel via PrefetchScalarGridSpec + pl.Element row BlockSpecs.

    pair_x = data["pair_x"]                                    # [B, P, F]
    px_src = pair_x[:, 0, :]                                   # [B, F]
    px_dst = pair_x[:, 1, :]                                   # [B, F]

    # Single fused Pallas kernel: encoder+LN, encoder, products, lin1, lin2.
    return fused_pair_head(z_emb_src, z_emb_dst, px_src, px_dst, params)  # [B, 1]


# ----------------------------- demo -----------------------------

if __name__ == "__main__":
    hidden = 32
    num_features = 16
    max_z = 100
    nodes_per_graph = 8
    num_graphs = 2
    N = nodes_per_graph * num_graphs
    E = 32
    pair_nodes = 8

    key = jax.random.PRNGKey(0)
    kp, kd = jax.random.split(key)
    params = init_params(kp, hidden, num_features, max_z)

    kd1, kd2, kd3, kd4 = jax.random.split(kd, 4)
    data = {
        # data.x : [N, num_features]; col 0 is a categorical node id (< 371)
        "x": jnp.concatenate(
            [jax.random.randint(kd1, (N, 1), 0, 371),
             jax.random.randint(kd2, (N, num_features - 1), 0, 5)], axis=1
        ).astype(jnp.int32),
        "z": jax.random.randint(kd3, (N,), 0, max_z).astype(jnp.int32),
        "edge_feat": jax.random.randint(kd4, (E,), 0, 2).astype(jnp.int32),
        "batch": jnp.repeat(jnp.arange(num_graphs), nodes_per_graph).astype(jnp.int32),
        "pair_x": jax.random.normal(kd, (num_graphs, pair_nodes, num_features), jnp.float32),
    }

    # center_indices = first occurrence of each graph id (np.unique(..., return_index=True))
    _, center_np = np.unique(np.asarray(data["batch"]), return_index=True)
    center_indices = jnp.asarray(center_np, dtype=jnp.int32)

    out = san_graphormer_forward(params, data, center_indices)
    out = jax.block_until_ready(out)
    assert out.shape == (num_graphs, 1)
    assert bool(jnp.all(jnp.isfinite(out)))
    print("KERNEL_OK")
</pallas_src>

<mosaic_0001>
module attributes {stable_mosaic.version = 11 : i64} {
  func.func @_fused_head_kernel(%arg0: i32, %arg1: memref<2x32xf32, #tpu.memory_space<vmem>>, %arg2: memref<2x32xf32, #tpu.memory_space<vmem>>, %arg3: memref<2x16xf32, #tpu.memory_space<vmem>>, %arg4: memref<2x16xf32, #tpu.memory_space<vmem>>, %arg5: memref<32x32xbf16, #tpu.memory_space<vmem>>, %arg6: memref<1x32xf32, #tpu.memory_space<vmem>>, %arg7: memref<1x32xf32, #tpu.memory_space<vmem>>, %arg8: memref<1x32xf32, #tpu.memory_space<vmem>>, %arg9: memref<16x32xbf16, #tpu.memory_space<vmem>>, %arg10: memref<1x32xf32, #tpu.memory_space<vmem>>, %arg11: memref<64x32xbf16, #tpu.memory_space<vmem>>, %arg12: memref<1x32xf32, #tpu.memory_space<vmem>>, %arg13: memref<1x32xf32, #tpu.memory_space<vmem>>, %arg14: memref<1x1xf32, #tpu.memory_space<vmem>>, %arg15: memref<2x1xf32, #tpu.memory_space<vmem>>) attributes {dimension_semantics = [#tpu.dimension_semantics<parallel>], iteration_bounds = array<i64: 1>, scalar_prefetch = 0 : i64, scratch_operands = 0 : i64, tpu.core_type = #tpu.core_type<tc>, window_params = [{transform_indices = @transform_0, window_bounds = array<i64: 2, 32>}, {transform_indices = @transform_1, window_bounds = array<i64: 2, 32>}, {transform_indices = @transform_2, window_bounds = array<i64: 2, 16>}, {transform_indices = @transform_3, window_bounds = array<i64: 2, 16>}, {pipeline_mode = #tpu.pipeline_mode<synchronous>, transform_indices = @transform_4, window_bounds = array<i64: 32, 32>}, {pipeline_mode = #tpu.pipeline_mode<synchronous>, transform_indices = @transform_5, window_bounds = array<i64: 1, 32>}, {pipeline_mode = #tpu.pipeline_mode<synchronous>, transform_indices = @transform_6, window_bounds = array<i64: 1, 32>}, {pipeline_mode = #tpu.pipeline_mode<synchronous>, transform_indices = @transform_7, window_bounds = array<i64: 1, 32>}, {pipeline_mode = #tpu.pipeline_mode<synchronous>, transform_indices = @transform_8, window_bounds = array<i64: 16, 32>}, {pipeline_mode = #tpu.pipeline_mode<synchronous>, transform_indices = @transform_9, window_bounds = array<i64: 1, 32>}, {pipeline_mode = #tpu.pipeline_mode<synchronous>, transform_indices = @transform_10, window_bounds = array<i64: 64, 32>}, {pipeline_mode = #tpu.pipeline_mode<synchronous>, transform_indices = @transform_11, window_bounds = array<i64: 1, 32>}, {pipeline_mode = #tpu.pipeline_mode<synchronous>, transform_indices = @transform_12, window_bounds = array<i64: 1, 32>}, {pipeline_mode = #tpu.pipeline_mode<synchronous>, transform_indices = @transform_13, window_bounds = array<i64: 1, 1>}, {transform_indices = @transform_14, window_bounds = array<i64: 2, 1>}]} {
    %c0 = arith.constant 0 : index
    %c0_0 = arith.constant 0 : index
    %0 = vector.load %arg1[%c0, %c0_0] : memref<2x32xf32, #tpu.memory_space<vmem>>, vector<2x32xf32>
    %c0_1 = arith.constant 0 : index
    %c0_2 = arith.constant 0 : index
    %1 = vector.load %arg2[%c0_1, %c0_2] : memref<2x32xf32, #tpu.memory_space<vmem>>, vector<2x32xf32>
    %2 = tpu.concatenate %0, %1 in 0 : vector<2x32xf32>, vector<2x32xf32> -> vector<4x32xf32>
    %3 = arith.truncf %2 : vector<4x32xf32> to vector<4x32xbf16>
    %c0_3 = arith.constant 0 : index
    %c0_4 = arith.constant 0 : index
    %4 = vector.load %arg5[%c0_3, %c0_4] : memref<32x32xbf16, #tpu.memory_space<vmem>>, vector<32x32xbf16>
    %cst = arith.constant dense<0.000000e+00> : vector<4x32xf32>
    %5 = tpu.matmul %3, %4, %cst {dimension_numbers = #tpu.dot_dimension_numbers<[1], [0], [0], [1], [0, 0, 1, 1], [], []>} : vector<4x32xbf16>, vector<32x32xbf16>, vector<4x32xf32> -> vector<4x32xf32>
    %c0_5 = arith.constant 0 : index
    %c0_6 = arith.constant 0 : index
    %6 = vector.load %arg6[%c0_5, %c0_6] : memref<1x32xf32, #tpu.memory_space<vmem>>, vector<1x32xf32>
    %7 = vector.broadcast %6 : vector<1x32xf32> to vector<4x32xf32>
    %8 = arith.addf %5, %7 : vector<4x32xf32>
    %cst_7 = arith.constant dense<0.000000e+00> : vector<4xf32>
    %9 = vector.multi_reduction <add>, %8, %cst_7 [1] : vector<4x32xf32> to vector<4xf32>
    %10 = vector.shape_cast %9 : vector<4xf32> to vector<4x1xf32>
    %cst_8 = arith.constant 3.200000e+01 : f32
    %11 = vector.broadcast %cst_8 : f32 to vector<4x1xf32>
    %12 = arith.divf %10, %11 : vector<4x1xf32>
    %13 = vector.broadcast %12 : vector<4x1xf32> to vector<4x32xf32>
    %14 = arith.subf %8, %13 : vector<4x32xf32>
    %15 = arith.mulf %14, %14 : vector<4x32xf32>
    %cst_9 = arith.constant dense<0.000000e+00> : vector<4xf32>
    %16 = vector.multi_reduction <add>, %15, %cst_9 [1] : vector<4x32xf32> to vector<4xf32>
    %17 = vector.shape_cast %16 : vector<4xf32> to vector<4x1xf32>
    %cst_10 = arith.constant 3.200000e+01 : f32
    %18 = vector.broadcast %cst_10 : f32 to vector<4x1xf32>
    %19 = arith.divf %17, %18 : vector<4x1xf32>
    %20 = vector.broadcast %12 : vector<4x1xf32> to vector<4x32xf32>
    %21 = arith.subf %8, %20 : vector<4x32xf32>
    %cst_11 = arith.constant 9.99999974E-6 : f32
    %22 = vector.broadcast %cst_11 : f32 to vector<4x1xf32>
    %23 = arith.addf %19, %22 : vector<4x1xf32>
    %24 = math.rsqrt %23 : vector<4x1xf32>
    %25 = vector.broadcast %24 : vector<4x1xf32> to vector<4x32xf32>
    %26 = arith.mulf %21, %25 : vector<4x32xf32>
    %c0_12 = arith.constant 0 : index
    %c0_13 = arith.constant 0 : index
    %27 = vector.load %arg7[%c0_12, %c0_13] : memref<1x32xf32, #tpu.memory_space<vmem>>, vector<1x32xf32>
    %28 = vector.broadcast %27 : vector<1x32xf32> to vector<4x32xf32>
    %29 = arith.mulf %26, %28 : vector<4x32xf32>
    %c0_14 = arith.constant 0 : index
    %c0_15 = arith.constant 0 : index
    %30 = vector.load %arg8[%c0_14, %c0_15] : memref<1x32xf32, #tpu.memory_space<vmem>>, vector<1x32xf32>
    %31 = vector.broadcast %30 : vector<1x32xf32> to vector<4x32xf32>
    %32 = arith.addf %29, %31 : vector<4x32xf32>
    %c0_16 = arith.constant 0 : index
    %c0_17 = arith.constant 0 : index
    %33 = vector.load %arg3[%c0_16, %c0_17] : memref<2x16xf32, #tpu.memory_space<vmem>>, vector<2x16xf32>
    %c0_18 = arith.constant 0 : index
    %c0_19 = arith.constant 0 : index
    %34 = vector.load %arg4[%c0_18, %c0_19] : memref<2x16xf32, #tpu.memory_space<vmem>>, vector<2x16xf32>
    %35 = tpu.concatenate %33, %34 in 0 : vector<2x16xf32>, vector<2x16xf32> -> vector<4x16xf32>
    %36 = arith.truncf %35 : vector<4x16xf32> to vector<4x16xbf16>
    %c0_20 = arith.constant 0 : index
    %c0_21 = arith.constant 0 : index
    %37 = vector.load %arg9[%c0_20, %c0_21] : memref<16x32xbf16, #tpu.memory_space<vmem>>, vector<16x32xbf16>
    %cst_22 = arith.constant dense<0.000000e+00> : vector<4x32xf32>
    %38 = tpu.matmul %36, %37, %cst_22 {dimension_numbers = #tpu.dot_dimension_numbers<[1], [0], [0], [1], [0, 0, 1, 1], [], []>} : vector<4x16xbf16>, vector<16x32xbf16>, vector<4x32xf32> -> vector<4x32xf32>
    %c0_23 = arith.constant 0 : index
    %c0_24 = arith.constant 0 : index
    %39 = vector.load %arg10[%c0_23, %c0_24] : memref<1x32xf32, #tpu.memory_space<vmem>>, vector<1x32xf32>
    %40 = vector.broadcast %39 : vector<1x32xf32> to vector<4x32xf32>
    %41 = arith.addf %38, %40 : vector<4x32xf32>
    %42 = vector.extract_strided_slice %32 {offsets = [0, 0], sizes = [2, 32], strides = [1, 1]} : vector<4x32xf32> to vector<2x32xf32>
    %43 = vector.extract_strided_slice %32 {offsets = [2, 0], sizes = [2, 32], strides = [1, 1]} : vector<4x32xf32> to vector<2x32xf32>
    %44 = arith.mulf %42, %43 : vector<2x32xf32>
    %45 = vector.extract_strided_slice %41 {offsets = [0, 0], sizes = [2, 32], strides = [1, 1]} : vector<4x32xf32> to vector<2x32xf32>
    %46 = vector.extract_strided_slice %41 {offsets = [2, 0], sizes = [2, 32], strides = [1, 1]} : vector<4x32xf32> to vector<2x32xf32>
    %47 = arith.mulf %45, %46 : vector<2x32xf32>
    %48 = arith.truncf %44 : vector<2x32xf32> to vector<2x32xbf16>
    %c0_25 = arith.constant 0 : index
    %c0_26 = arith.constant 0 : index
    %49 = vector.load %arg11[%c0_25, %c0_26] : memref<64x32xbf16, #tpu.memory_space<vmem>>, vector<32x32xbf16>
    %cst_27 = arith.constant dense<0.000000e+00> : vector<2x32xf32>
    %50 = tpu.matmul %48, %49, %cst_27 {dimension_numbers = #tpu.dot_dimension_numbers<[1], [0], [0], [1], [0, 0, 1, 1], [], []>} : vector<2x32xbf16>, vector<32x32xbf16>, vector<2x32xf32> -> vector<2x32xf32>
    %51 = arith.truncf %47 : vector<2x32xf32> to vector<2x32xbf16>
    %c32 = arith.constant 32 : index
    %c0_28 = arith.constant 0 : index
    %52 = vector.load %arg11[%c32, %c0_28] : memref<64x32xbf16, #tpu.memory_space<vmem>>, vector<32x32xbf16>
    %cst_29 = arith.constant dense<0.000000e+00> : vector<2x32xf32>
    %53 = tpu.matmul %51, %52, %cst_29 {dimension_numbers = #tpu.dot_dimension_numbers<[1], [0], [0], [1], [0, 0, 1, 1], [], []>} : vector<2x32xbf16>, vector<32x32xbf16>, vector<2x32xf32> -> vector<2x32xf32>
    %54 = arith.addf %50, %53 : vector<2x32xf32>
    %c0_30 = arith.constant 0 : index
    %c0_31 = arith.constant 0 : index
    %55 = vector.load %arg12[%c0_30, %c0_31] : memref<1x32xf32, #tpu.memory_space<vmem>>, vector<1x32xf32>
    %56 = vector.broadcast %55 : vector<1x32xf32> to vector<2x32xf32>
    %57 = arith.addf %54, %56 : vector<2x32xf32>
    %cst_32 = arith.constant 0.000000e+00 : f32
    %58 = vector.broadcast %cst_32 : f32 to vector<2x32xf32>
    %59 = arith.maximumf %57, %58 : vector<2x32xf32>
    %c0_33 = arith.constant 0 : index
    %c0_34 = arith.constant 0 : index
    %60 = vector.load %arg13[%c0_33, %c0_34] : memref<1x32xf32, #tpu.memory_space<vmem>>, vector<1x32xf32>
    %61 = vector.broadcast %60 : vector<1x32xf32> to vector<2x32xf32>
    %62 = arith.mulf %59, %61 : vector<2x32xf32>
    %cst_35 = arith.constant dense<0.000000e+00> : vector<2xf32>
    %63 = vector.multi_reduction <add>, %62, %cst_35 [1] : vector<2x32xf32> to vector<2xf32>
    %64 = vector.shape_cast %63 : vector<2xf32> to vector<2x1xf32>
    %c0_36 = arith.constant 0 : index
    %c0_37 = arith.constant 0 : index
    %65 = vector.load %arg14[%c0_36, %c0_37] : memref<1x1xf32, #tpu.memory_space<vmem>>, vector<1x1xf32>
    %66 = vector.broadcast %65 : vector<1x1xf32> to vector<2x1xf32>
    %67 = arith.addf %64, %66 : vector<2x1xf32>
    %c0_38 = arith.constant 0 : index
    %c0_39 = arith.constant 0 : index
    %68 = vector.load %arg15[%c0_38, %c0_39] : memref<2x1xf32, #tpu.memory_space<vmem>>, vector<2x1xf32>
    tpu.vector_store %arg15[%c0_38, %c0_39], %67 {strides = array<i32>} : memref<2x1xf32, #tpu.memory_space<vmem>>, vector<2x1xf32>,
    return
  }
  func.func @transform_0(%arg0: i32) -> (i32, i32) {
    %c0_i32 = arith.constant 0 : i32
    %c0_i32_0 = arith.constant 0 : i32
    return %arg0, %c0_i32 : i32, i32
  }
  func.func @transform_1(%arg0: i32) -> (i32, i32) {
    %c0_i32 = arith.constant 0 : i32
    %c0_i32_0 = arith.constant 0 : i32
    return %arg0, %c0_i32 : i32, i32
  }
  func.func @transform_2(%arg0: i32) -> (i32, i32) {
    %c0_i32 = arith.constant 0 : i32
    %c0_i32_0 = arith.constant 0 : i32
    return %arg0, %c0_i32 : i32, i32
  }
  func.func @transform_3(%arg0: i32) -> (i32, i32) {
    %c0_i32 = arith.constant 0 : i32
    %c0_i32_0 = arith.constant 0 : i32
    return %arg0, %c0_i32 : i32, i32
  }
  func.func @transform_4(%arg0: i32) -> (i32, i32) {
    %c0_i32 = arith.constant 0 : i32
    %c0_i32_0 = arith.constant 0 : i32
    %c0_i32_1 = arith.constant 0 : i32
    return %c0_i32, %c0_i32_0 : i32, i32
  }
  func.func @transform_5(%arg0: i32) -> (i32, i32) {
    %c0_i32 = arith.constant 0 : i32
    %c0_i32_0 = arith.constant 0 : i32
    %c0_i32_1 = arith.constant 0 : i32
    return %c0_i32, %c0_i32_0 : i32, i32
  }
  func.func @transform_6(%arg0: i32) -> (i32, i32) {
    %c0_i32 = arith.constant 0 : i32
    %c0_i32_0 = arith.constant 0 : i32
    %c0_i32_1 = arith.constant 0 : i32
    return %c0_i32, %c0_i32_0 : i32, i32
  }
  func.func @transform_7(%arg0: i32) -> (i32, i32) {
    %c0_i32 = arith.constant 0 : i32
    %c0_i32_0 = arith.constant 0 : i32
    %c0_i32_1 = arith.constant 0 : i32
    return %c0_i32, %c0_i32_0 : i32, i32
  }
  func.func @transform_8(%arg0: i32) -> (i32, i32) {
    %c0_i32 = arith.constant 0 : i32
    %c0_i32_0 = arith.constant 0 : i32
    %c0_i32_1 = arith.constant 0 : i32
    return %c0_i32, %c0_i32_0 : i32, i32
  }
  func.func @transform_9(%arg0: i32) -> (i32, i32) {
    %c0_i32 = arith.constant 0 : i32
    %c0_i32_0 = arith.constant 0 : i32
    %c0_i32_1 = arith.constant 0 : i32
    return %c0_i32, %c0_i32_0 : i32, i32
  }
  func.func @transform_10(%arg0: i32) -> (i32, i32) {
    %c0_i32 = arith.constant 0 : i32
    %c0_i32_0 = arith.constant 0 : i32
    %c0_i32_1 = arith.constant 0 : i32
    return %c0_i32, %c0_i32_0 : i32, i32
  }
  func.func @transform_11(%arg0: i32) -> (i32, i32) {
    %c0_i32 = arith.constant 0 : i32
    %c0_i32_0 = arith.constant 0 : i32
    %c0_i32_1 = arith.constant 0 : i32
    return %c0_i32, %c0_i32_0 : i32, i32
  }
  func.func @transform_12(%arg0: i32) -> (i32, i32) {
    %c0_i32 = arith.constant 0 : i32
    %c0_i32_0 = arith.constant 0 : i32
    %c0_i32_1 = arith.constant 0 : i32
    return %c0_i32, %c0_i32_0 : i32, i32
  }
  func.func @transform_13(%arg0: i32) -> (i32, i32) {
    %c0_i32 = arith.constant 0 : i32
    %c0_i32_0 = arith.constant 0 : i32
    %c0_i32_1 = arith.constant 0 : i32
    return %c0_i32, %c0_i32_0 : i32, i32
  }
  func.func @transform_14(%arg0: i32) -> (i32, i32) {
    %c0_i32 = arith.constant 0 : i32
    %c0_i32_0 = arith.constant 0 : i32
    return %arg0, %c0_i32 : i32, i32
  }
}

</mosaic_0001>

<llo_original>
// kernel: tpu_custom_call.1
$region0: #{tpu_custom_call.1}
  #allocation0 [shape = 'u32[]', space=smem, size = 0x4, offset = 0x4, fixed_abs, tag = 'smem constant byte address 0x4 - core index']
  #allocation1 [shape = 'u32[144,128]{1,0:T(1,128)}', space=vmem, size = 0x12000, scoped, tag = 'internal scratch']
  #allocation2 [shape = 'f32[1,1]{1,0:T(1,128)S(1)}', space=vmem, size = 0x200, scoped, tag = 'scoped memory for tpu_custom_call.1']
  %s0 = inlined_call_operand.vmem [shape: f32[2,32], index: 0, kind: input, shape index: {}]
  %s1 = inlined_call_operand.vmem [shape: f32[2,32], index: 1, kind: input, shape index: {}]
  %s2 = inlined_call_operand.vmem [shape: f32[2,16], index: 2, kind: input, shape index: {}]
  %s3 = inlined_call_operand.vmem [shape: f32[2,16], index: 3, kind: input, shape index: {}]
  %s4 = inlined_call_operand.vmem [shape: bf16[32,32], index: 4, kind: input, shape index: {}]
  %s5 = inlined_call_operand.vmem [shape: f32[1,32], index: 5, kind: input, shape index: {}]
  %s6 = inlined_call_operand.vmem [shape: f32[1,32], index: 6, kind: input, shape index: {}]
  %s7 = inlined_call_operand.vmem [shape: f32[1,32], index: 7, kind: input, shape index: {}]
  %s8 = inlined_call_operand.vmem [shape: bf16[16,32], index: 8, kind: input, shape index: {}]
  %s9 = inlined_call_operand.vmem [shape: f32[1,32], index: 9, kind: input, shape index: {}]
  %s10 = inlined_call_operand.vmem [shape: bf16[64,32], index: 10, kind: input, shape index: {}]
  %s11 = inlined_call_operand.vmem [shape: f32[1,32], index: 11, kind: input, shape index: {}]
  %s12 = inlined_call_operand.vmem [shape: f32[1,32], index: 12, kind: input, shape index: {}]
  %s13 = inlined_call_operand.<no memory space> [shape: f32[1,1], index: 13, kind: input, shape index: {}]
  %s14 = inlined_call_operand.vmem [shape: f32[2,1], index: 14, kind: output, shape index: {}]
  %s15 = sld [smem:[#allocation0]]
  $region66: #{tpu_custom_call.1} parent=0
    _
  %s17 = ssub.s32 1, %s15
  %s18 = scalar_select 0, %s17, %s15
  %v19 = vstv %s13
  %20 = vst [vmem:[#allocation2] sm:$0x1] %v19
  // Predicated region
  $region2: #{tpu_custom_call.1} parent=0 // pred_check
    _
  $region3: #{tpu_custom_call.1} parent=0 // pred_check_branch
    %22 = sbr.rel (0) target = $region5
  $region4: #{tpu_custom_call.1} parent=0 // pred_region
    _
  $region5: #{tpu_custom_call.1} parent=0 // pred_fallthru
    _
  // Predicated region
  $region6: #{tpu_custom_call.1} parent=0 // pred_check
    _
  $region7: #{tpu_custom_call.1} parent=0 // pred_check_branch
    %24 = sbr.rel (0) target = $region9
  $region8: #{tpu_custom_call.1} parent=0 // pred_region
    _
  $region9: #{tpu_custom_call.1} parent=0 // pred_fallthru
    _
  // Predicated region
  $region10: #{tpu_custom_call.1} parent=0 // pred_check
    _
  $region11: #{tpu_custom_call.1} parent=0 // pred_check_branch
    %26 = sbr.rel (0) target = $region13
  $region12: #{tpu_custom_call.1} parent=0 // pred_region
    _
  $region13: #{tpu_custom_call.1} parent=0 // pred_fallthru
    _
  // Predicated region
  $region14: #{tpu_custom_call.1} parent=0 // pred_check
    _
  $region15: #{tpu_custom_call.1} parent=0 // pred_check_branch
    %28 = sbr.rel (0) target = $region17
  $region16: #{tpu_custom_call.1} parent=0 // pred_region
    _
  $region17: #{tpu_custom_call.1} parent=0 // pred_fallthru
    _
  // Predicated region
  $region18: #{tpu_custom_call.1} parent=0 // pred_check
    _
  $region19: #{tpu_custom_call.1} parent=0 // pred_check_branch
    %30 = sbr.rel (0) target = $region21
  $region20: #{tpu_custom_call.1} parent=0 // pred_region
    _
  $region21: #{tpu_custom_call.1} parent=0 // pred_fallthru
    _
  // Predicated region
  $region22: #{tpu_custom_call.1} parent=0 // pred_check
    _
  $region23: #{tpu_custom_call.1} parent=0 // pred_check_branch
    %32 = sbr.rel (0) target = $region25
  $region24: #{tpu_custom_call.1} parent=0 // pred_region
    _
  $region25: #{tpu_custom_call.1} parent=0 // pred_fallthru
    _
  // Predicated region
  $region26: #{tpu_custom_call.1} parent=0 // pred_check
    _
  $region27: #{tpu_custom_call.1} parent=0 // pred_check_branch
    %34 = sbr.rel (0) target = $region29
  $region28: #{tpu_custom_call.1} parent=0 // pred_region
    _
  $region29: #{tpu_custom_call.1} parent=0 // pred_fallthru
    _
  // Predicated region
  $region30: #{tpu_custom_call.1} parent=0 // pred_check
    _
  $region31: #{tpu_custom_call.1} parent=0 // pred_check_branch
    %36 = sbr.rel (0) target = $region33
  $region32: #{tpu_custom_call.1} parent=0 // pred_region
    _
  $region33: #{tpu_custom_call.1} parent=0 // pred_fallthru
    _
  // Predicated region
  $region34: #{tpu_custom_call.1} parent=0 // pred_check
    _
  $region35: #{tpu_custom_call.1} parent=0 // pred_check_branch
    %38 = sbr.rel (0) target = $region37
  $region36: #{tpu_custom_call.1} parent=0 // pred_region
    _
  $region37: #{tpu_custom_call.1} parent=0 // pred_fallthru
    _
  // Predicated region
  $region38: #{tpu_custom_call.1} parent=0 // pred_check
    _
  $region39: #{tpu_custom_call.1} parent=0 // pred_check_branch
    %40 = sbr.rel (0) target = $region41
  $region40: #{tpu_custom_call.1} parent=0 // pred_region
    _
  $region41: #{tpu_custom_call.1} parent=0 // pred_fallthru
    _
  // Predicated region
  $region42: #{tpu_custom_call.1} parent=0 // pred_check
    _
  $region43: #{tpu_custom_call.1} parent=0 // pred_check_branch
    %42 = sbr.rel (0) target = $region45
  $region44: #{tpu_custom_call.1} parent=0 // pred_region
    _
  $region45: #{tpu_custom_call.1} parent=0 // pred_fallthru
    _
  // Predicated region
  $region46: #{tpu_custom_call.1} parent=0 // pred_check
    _
  $region47: #{tpu_custom_call.1} parent=0 // pred_check_branch
    %44 = sbr.rel (0) target = $region49
  $region48: #{tpu_custom_call.1} parent=0 // pred_region
    _
  $region49: #{tpu_custom_call.1} parent=0 // pred_fallthru
    _
  // Predicated region
  $region50: #{tpu_custom_call.1} parent=0 // pred_check
    _
  $region51: #{tpu_custom_call.1} parent=0 // pred_check_branch
    %46 = sbr.rel (0) target = $region53
  $region52: #{tpu_custom_call.1} parent=0 // pred_region
    _
  $region53: #{tpu_custom_call.1} parent=0 // pred_fallthru
    _
  // Predicated region
  $region54: #{tpu_custom_call.1} parent=0 // pred_check
    _
  $region55: #{tpu_custom_call.1} parent=0 // pred_check_branch
    %48 = sbr.rel (0) target = $region57
  $region56: #{tpu_custom_call.1} parent=0 // pred_region
    _
  $region57: #{tpu_custom_call.1} parent=0 // pred_fallthru
    _
  %v50 = vld [vmem:[%s0] sm:$0x3]
  %v51 = vld [vmem:[%s1] sm:$0x3]
  %v53 = vrot.slane %v51, 6
  %vm55 = vcmask 1041408
  %v56 = vsel %vm55, %v50, %v53
  %v57 = vpack.c.bf16 %v56, %v56
  %v58 = vld [vmem:[%s4] sm:$0xf]
  %v59 = vld [vmem:[%s4 + $0x4] sm:$0xf]
  %v60 = vld [vmem:[%s4 + $0x8] sm:$0xf]
  %v61 = vld [vmem:[%s4 + $0xc] sm:$0xf]
  %v62 = vld [vmem:[%s5] sm:$0x1]
  %v64 = vlaneseq
  %v65 = vshrl.u32 %v64, 7
  %v66 = vsub.s32 0, %v65
  %v67 = vrot.slane %v62, %v66
  %v73 = vunpack.c.l.b16 %v58
  %v74 = vunpack.c.l.b16 %v59
  %v75 = vunpack.c.l.b16 %v60
  %v76 = vunpack.c.l.b16 %v61
  %v77 = vpack.c.b16 %v74, %v73
  %v78 = vpack.c.b16 %v76, %v75
  %vm81 = vcmask 261120
  %v83 = vsel %vm81, %v57, 0
  %85 = vmatprep.subr.bf16.mxu0 0
  %86 = vmatpush1.bf16.msra.mxu0 %v77
  %87 = vmatprep.subr.bf16.mxu0 0
  %88 = vmatpush1.bf16.msra.mxu0 %v78
  %89 = vmatprep.subr.bf16.mxu0 0
  %90 = vmatpush1.bf16.msra.mxu0 0
  %91 = vmatprep.subr.bf16.mxu0 0
  %92 = vmatpush1.bf16.msra.mxu0 0
  %93 = vmatprep.subr.bf16.mxu0 0
  %94 = vmatpush1.bf16.msra.mxu0 0
  %95 = vmatprep.subr.bf16.mxu0 0
  %96 = vmatpush1.bf16.msra.mxu0 0
  %97 = vmatprep.subr.bf16.mxu0 0
  %98 = vmatpush1.bf16.msra.mxu0 0
  %99 = vmatprep.subr.bf16.mxu0 0
  %100 = vmatpush1.bf16.msra.mxu0 0
  %101 = vmatprep.subr.bf16.mxu0 0
  %102 = vmatpush1.bf16.msra.mxu0 0
  %103 = vmatprep.subr.bf16.mxu0 0
  %104 = vmatpush1.bf16.msra.mxu0 0
  %105 = vmatprep.subr.bf16.mxu0 0
  %106 = vmatpush1.bf16.msra.mxu0 0
  %107 = vmatprep.subr.bf16.mxu0 0
  %108 = vmatpush1.bf16.msra.mxu0 0
  %109 = vmatprep.subr.bf16.mxu0 0
  %110 = vmatpush1.bf16.msra.mxu0 0
  %111 = vmatprep.subr.bf16.mxu0 0
  %112 = vmatpush1.bf16.msra.mxu0 0
  %113 = vmatprep.subr.bf16.mxu0 0
  %114 = vmatpush1.bf16.msra.mxu0 0
  %115 = vmatprep.subr.bf16.mxu0 0
  %116 = vmatpush1.bf16.msra.mxu0 0
  %117 = vmatprep.mubr.bf16.mxu0 0
  %118 = vmatmul.mubr.bf16.gmra.mrb[0].mxu0 %v83
  %v119 = vpop.f32.mrb[0].mxu0
  %v120 = vadd.f32 %v67, %v119
  %v121 = vpop.f32.mrb[0].mxu0
  %v122 = vpop.f32.mrb[0].mxu0
  %v123 = vpop.f32.mrb[0].mxu0
  %124 = vdwg.mxu0
  %vm125 = vcmask 257024
  %v126 = vsel %vm125, %v120, 0.0
  %127 = vadd.xlane.f32.xlu0 %v126
  %v128 = vpop.xlane.xlu0 %127
  %v129 = vrcp.pop 32.0
  %v130 = vmul.f32 %v128, %v129
  %v131 = vsub.f32 %v120, %v130
  %v132 = vmul.f32 %v131, %v131
  %v133 = vsel %vm125, %v132, 0.0
  %134 = vadd.xlane.f32.xlu0 %v133
  %v135 = vpop.xlane.xlu0 %134
  %v136 = vmul.f32 %v135, %v129
  %v137 = vadd.f32 %v136, 1e-05
  %v138 = vrsqrt.pop %v137
  %v139 = vmul.f32 %v131, %v138
  %v140 = vld [vmem:[%s6] sm:$0x1]
  %v142 = vlaneseq
  %v143 = vshrl.u32 %v142, 7
  %v144 = vsub.s32 0, %v143
  %v145 = vrot.slane %v140, %v144
  %v147 = vmul.f32 %v139, %v145
  %v148 = vld [vmem:[%s7] sm:$0x1]
  %v150 = vlaneseq
  %v151 = vshrl.u32 %v150, 7
  %v152 = vsub.s32 0, %v151
  %v153 = vrot.slane %v148, %v152
  %v155 = vadd.f32 %v147, %v153
  %v156 = vld [vmem:[%s2] sm:$0x3]
  %v157 = vld [vmem:[%s3] sm:$0x3]
  %v159 = vrot.slane %v157, 6
  %v161 = vsel %vm55, %v156, %v159
  %v162 = vpack.c.bf16 %v161, %v161
  %v163 = vld [vmem:[%s8] sm:$0xf]
  %v164 = vld [vmem:[%s8 + $0x4] sm:$0xf]
  %v165 = vld [vmem:[%s9] sm:$0x1]
  %v167 = vlaneseq
  %v168 = vshrl.u32 %v167, 7
  %v169 = vsub.s32 0, %v168
  %v170 = vrot.slane %v165, %v169
  %v174 = vunpack.c.l.b16 %v163
  %v175 = vunpack.c.l.b16 %v164
  %v176 = vpack.c.b16 %v175, %v174
  %vm178 = vcmask 130048
  %v180 = vsel %vm178, %v162, 0
  %182 = vmatprep.subr.bf16.mxu0 0
  %183 = vmatpush1.bf16.msra.mxu0 %v176
  %184 = vmatprep.subr.bf16.mxu0 0
  %185 = vmatpush1.bf16.msra.mxu0 0
  %186 = vmatprep.subr.bf16.mxu0 0
  %187 = vmatpush1.bf16.msra.mxu0 0
  %188 = vmatprep.subr.bf16.mxu0 0
  %189 = vmatpush1.bf16.msra.mxu0 0
  %190 = vmatprep.subr.bf16.mxu0 0
  %191 = vmatpush1.bf16.msra.mxu0 0
  %192 = vmatprep.subr.bf16.mxu0 0
  %193 = vmatpush1.bf16.msra.mxu0 0
  %194 = vmatprep.subr.bf16.mxu0 0
  %195 = vmatpush1.bf16.msra.mxu0 0
  %196 = vmatprep.subr.bf16.mxu0 0
  %197 = vmatpush1.bf16.msra.mxu0 0
  %198 = vmatprep.subr.bf16.mxu0 0
  %199 = vmatpush1.bf16.msra.mxu0 0
  %200 = vmatprep.subr.bf16.mxu0 0
  %201 = vmatpush1.bf16.msra.mxu0 0
  %202 = vmatprep.subr.bf16.mxu0 0
  %203 = vmatpush1.bf16.msra.mxu0 0
  %204 = vmatprep.subr.bf16.mxu0 0
  %205 = vmatpush1.bf16.msra.mxu0 0
  %206 = vmatprep.subr.bf16.mxu0 0
  %207 = vmatpush1.bf16.msra.mxu0 0
  %208 = vmatprep.subr.bf16.mxu0 0
  %209 = vmatpush1.bf16.msra.mxu0 0
  %210 = vmatprep.subr.bf16.mxu0 0
  %211 = vmatpush1.bf16.msra.mxu0 0
  %212 = vmatprep.subr.bf16.mxu0 0
  %213 = vmatpush1.bf16.msra.mxu0 0
  %214 = vmatprep.mubr.bf16.mxu0 0
  %215 = vmatmul.mubr.bf16.gmra.mrb[0].mxu0 %v180
  %v216 = vpop.f32.mrb[0].mxu0
  %v217 = vadd.f32 %v170, %v216
  %v218 = vpop.f32.mrb[0].mxu0
  %v219 = vpop.f32.mrb[0].mxu0
  %v220 = vpop.f32.mrb[0].mxu0
  %221 = vdwg.mxu0
  %v223 = vrot.slane %v155, 2
  %v225 = vmul.f32 %v155, %v223
  %v227 = vrot.slane %v217, 2
  %v229 = vmul.f32 %v217, %v227
  %v230 = vpack.c.bf16 %v225, %v225
  %v231 = vld [vmem:[%s10] sm:$0xf]
  %v232 = vld [vmem:[%s10 + $0x4] sm:$0xf]
  %v233 = vld [vmem:[%s10 + $0x8] sm:$0xf]
  %v234 = vld [vmem:[%s10 + $0xc] sm:$0xf]
  %v235 = vpack.c.bf16 %v229, %v229
  %v236 = vld [vmem:[%s10 + $0x10] sm:$0xf]
  %v237 = vld [vmem:[%s10 + $0x14] sm:$0xf]
  %v238 = vld [vmem:[%s10 + $0x18] sm:$0xf]
  %v239 = vld [vmem:[%s10 + $0x1c] sm:$0xf]
  %v244 = vunpack.c.l.b16 %v236
  %v245 = vunpack.c.l.b16 %v237
  %v246 = vunpack.c.l.b16 %v238
  %v247 = vunpack.c.l.b16 %v239
  %v248 = vpack.c.b16 %v245, %v244
  %v249 = vpack.c.b16 %v247, %v246
  %v253 = vsel %vm81, %v235, 0
  %255 = vmatprep.subr.bf16.mxu0 0
  %256 = vmatpush1.bf16.msra.mxu0 %v248
  %257 = vmatprep.subr.bf16.mxu0 0
  %258 = vmatpush1.bf16.msra.mxu0 %v249
  %259 = vmatprep.subr.bf16.mxu0 0
  %260 = vmatpush1.bf16.msra.mxu0 0
  %261 = vmatprep.subr.bf16.mxu0 0
  %262 = vmatpush1.bf16.msra.mxu0 0
  %263 = vmatprep.subr.bf16.mxu0 0
  %264 = vmatpush1.bf16.msra.mxu0 0
  %265 = vmatprep.subr.bf16.mxu0 0
  %266 = vmatpush1.bf16.msra.mxu0 0
  %267 = vmatprep.subr.bf16.mxu0 0
  %268 = vmatpush1.bf16.msra.mxu0 0
  %269 = vmatprep.subr.bf16.mxu0 0
  %270 = vmatpush1.bf16.msra.mxu0 0
  %271 = vmatprep.subr.bf16.mxu0 0
  %272 = vmatpush1.bf16.msra.mxu0 0
  %273 = vmatprep.subr.bf16.mxu0 0
  %274 = vmatpush1.bf16.msra.mxu0 0
  %275 = vmatprep.subr.bf16.mxu0 0
  %276 = vmatpush1.bf16.msra.mxu0 0
  %277 = vmatprep.subr.bf16.mxu0 0
  %278 = vmatpush1.bf16.msra.mxu0 0
  %279 = vmatprep.subr.bf16.mxu0 0
  %280 = vmatpush1.bf16.msra.mxu0 0
  %281 = vmatprep.subr.bf16.mxu0 0
  %282 = vmatpush1.bf16.msra.mxu0 0
  %283 = vmatprep.subr.bf16.mxu0 0
  %284 = vmatpush1.bf16.msra.mxu0 0
  %285 = vmatprep.subr.bf16.mxu0 0
  %286 = vmatpush1.bf16.msra.mxu0 0
  %287 = vmatprep.mubr.bf16.mxu0 0
  %288 = vmatmul.mubr.bf16.gmra.mrb[0].mxu0 %v253
  %v289 = vpop.f32.mrb[0].mxu0
  %v290 = vadd.f32 0.0, %v289
  %v291 = vpop.f32.mrb[0].mxu0
  %v292 = vpop.f32.mrb[0].mxu0
  %v293 = vpop.f32.mrb[0].mxu0
  %294 = vdwg.mxu0
  %v299 = vunpack.c.l.b16 %v231
  %v300 = vunpack.c.l.b16 %v232
  %v301 = vunpack.c.l.b16 %v233
  %v302 = vunpack.c.l.b16 %v234
  %v303 = vpack.c.b16 %v300, %v299
  %v304 = vpack.c.b16 %v302, %v301
  %v308 = vsel %vm81, %v230, 0
  %310 = vmatprep.subr.bf16.mxu0 0
  %311 = vmatpush1.bf16.msra.mxu0 %v303
  %312 = vmatprep.subr.bf16.mxu0 0
  %313 = vmatpush1.bf16.msra.mxu0 %v304
  %314 = vmatprep.subr.bf16.mxu0 0
  %315 = vmatpush1.bf16.msra.mxu0 0
  %316 = vmatprep.subr.bf16.mxu0 0
  %317 = vmatpush1.bf16.msra.mxu0 0
  %318 = vmatprep.subr.bf16.mxu0 0
  %319 = vmatpush1.bf16.msra.mxu0 0
  %320 = vmatprep.subr.bf16.mxu0 0
  %321 = vmatpush1.bf16.msra.mxu0 0
  %322 = vmatprep.subr.bf16.mxu0 0
  %323 = vmatpush1.bf16.msra.mxu0 0
  %324 = vmatprep.subr.bf16.mxu0 0
  %325 = vmatpush1.bf16.msra.mxu0 0
  %326 = vmatprep.subr.bf16.mxu0 0
  %327 = vmatpush1.bf16.msra.mxu0 0
  %328 = vmatprep.subr.bf16.mxu0 0
  %329 = vmatpush1.bf16.msra.mxu0 0
  %330 = vmatprep.subr.bf16.mxu0 0
  %331 = vmatpush1.bf16.msra.mxu0 0
  %332 = vmatprep.subr.bf16.mxu0 0
  %333 = vmatpush1.bf16.msra.mxu0 0
  %334 = vmatprep.subr.bf16.mxu0 0
  %335 = vmatpush1.bf16.msra.mxu0 0
  %336 = vmatprep.subr.bf16.mxu0 0
  %337 = vmatpush1.bf16.msra.mxu0 0
  %338 = vmatprep.subr.bf16.mxu0 0
  %339 = vmatpush1.bf16.msra.mxu0 0
  %340 = vmatprep.subr.bf16.mxu0 0
  %341 = vmatpush1.bf16.msra.mxu0 0
  %342 = vmatprep.mubr.bf16.mxu0 0
  %343 = vmatmul.mubr.bf16.gmra.mrb[0].mxu0 %v308
  %v344 = vpop.f32.mrb[0].mxu0
  %v345 = vadd.f32 %v290, %v344
  %v346 = vpop.f32.mrb[0].mxu0
  %v347 = vpop.f32.mrb[0].mxu0
  %v348 = vpop.f32.mrb[0].mxu0
  %349 = vdwg.mxu0
  %v350 = vld [vmem:[%s11] sm:$0x1]
  %v352 = vlaneseq
  %v353 = vshrl.u32 %v352, 7
  %v354 = vsub.s32 0, %v353
  %v355 = vrot.slane %v350, %v354
  %v357 = vadd.f32 %v345, %v355
  %v358 = vmax.f32 %v357, 0.0
  %v359 = vld [vmem:[%s12] sm:$0x1]
  %v361 = vlaneseq
  %v362 = vshrl.u32 %v361, 7
  %v363 = vsub.s32 0, %v362
  %v364 = vrot.slane %v359, %v363
  %v366 = vmul.f32 %v358, %v364
  %vm367 = vcmask 254976
  %v368 = vsel %vm367, %v366, 0.0
  %369 = vadd.xlane.f32.xlu0 %v368
  %v370 = vpop.xlane.xlu0 %369
  %v371 = vld [vmem:[#allocation2] sm:$0x1]
  %v373 = vlaneseq
  %v374 = vshrl.u32 %v373, 7
  %v375 = vsub.s32 0, %v374
  %v376 = vrot.slane %v371, %v375
  %v378 = vadd.f32 %v370, %v376
  %vm379 = vcmask 1024
  %380 = vst.msk [vmem:[%s14] sm:$0x3] %vm379, %v378
  // Predicated region
  $region58: #{tpu_custom_call.1} parent=0 // pred_check
    _
  $region59: #{tpu_custom_call.1} parent=0 // pred_check_branch
    %382 = sbr.rel (0) target = $region61
  $region60: #{tpu_custom_call.1} parent=0 // pred_region
    _
  $region61: #{tpu_custom_call.1} parent=0 // pred_fallthru
    _
  // Predicated region
  $region62: #{tpu_custom_call.1} parent=0 // pred_check
    _
  $region63: #{tpu_custom_call.1} parent=0 // pred_check_branch
    %384 = sbr.rel (0) target = $region65
  $region64: #{tpu_custom_call.1} parent=0 // pred_region
    _
  $region65: #{tpu_custom_call.1} parent=0 // pred_fallthru
    _

</llo_original>
